<compile_context>
chip_gen: v5e
topology: v5e:2x2
jax: 0.10.0
libtpu: 0.0.40
codegen_flags: <defaults>
</compile_context>

<pallas_src>
import functools

import jax
import jax.numpy as jnp
from jax.experimental import pallas as pl
from jax.experimental.pallas import tpu as pltpu


def _round_up(x, m):
    return (x + m - 1) // m * m


# ---------------------------------------------------------------------------
# Fused Pallas kernel: im2col conv (all widths) + streamed max-pool + bias/ReLU
# + linear epilogue, one grid step per batch tile.
# ---------------------------------------------------------------------------
def _textcnn_fused_kernel(x_ref, w_conv_ref, b_conv_ref, w_lin_ref, b_lin_ref,
                          o_ref, cols_ref, *, Kmax, WD, Lout, Lchunk):
    # x_ref:      (Bt, Lalloc, WD)      bf16  padded embeddings, channels-last
    # w_conv_ref: (Kmax*WD, Npad)       bf16  combined conv weight, im2col row order k*WD+c
    # b_conv_ref: (1, Npad)             f32   combined conv bias
    # w_lin_ref:  (Npad, Cpad)          bf16  classifier weight (zero rows/cols on padding)
    # b_lin_ref:  (1, Cpad)             f32   classifier bias (zero on padded classes)
    # o_ref:      (Bt, Cpad)            f32   logits (lane-dense store)
    # cols_ref:   (Bt*Lchunk, Kmax*WD)  bf16  im2col scratch (write-once per chunk)
    Bt = x_ref.shape[0]
    Npad = w_conv_ref.shape[1]
    w_flat = w_conv_ref[...]                                   # resident across chunks

    n_chunks = (Lout + Lchunk - 1) // Lchunk
    # TODO(synk): for very long sequences replace this static chunk unroll with a
    # fori_loop / second grid axis to bound trace size; VMEM is already bounded per chunk.
    running = None
    for c in range(n_chunks):                                  # streamed max-pool over L
        l0 = c * Lchunk
        # Build the im2col slab with pure stores (no accumulator RMW).
        for k in range(Kmax):
            xk = x_ref[:, pl.ds(l0 + k, Lchunk), :]            # (Bt, Lchunk, WD) shifted window
            cols_ref[:, k * WD:(k + 1) * WD] = xk.reshape(Bt * Lchunk, WD)
        # One deep matmul per chunk: contraction depth Kmax*WD, f32 accumulation.
        y = jnp.dot(cols_ref[...], w_flat,
                    preferred_element_type=jnp.float32)        # (Bt*Lchunk, Npad)
        y = y.reshape(Bt, Lchunk, Npad)
        n_valid = Lout - l0
        if n_valid < Lchunk:                                   # ragged tail chunk: mask extras
            pos = jax.lax.broadcasted_iota(jnp.int32, (Lchunk, Npad), 0)
            y = jnp.where(pos < n_valid, y, -jnp.inf)
        cmax = jnp.max(y, axis=1)                              # (Bt, Npad) chunk max
        running = cmax if running is None else jnp.maximum(running, cmax)

    # bias + ReLU hoisted after the pool (bias constant over L, ReLU monotone).
    feat = jnp.maximum(running + b_conv_ref[...], 0.0)
    o_ref[...] = (jnp.dot(feat.astype(w_lin_ref.dtype), w_lin_ref[...],
                          preferred_element_type=jnp.float32)
                  + b_lin_ref[...])


def _textcnn_fused_call(x, w_conv, b_conv, w_lin, b_lin, *,
                        b_tile, Kmax, Lout, Lchunk):
    Bp, Lalloc, WD = x.shape
    KW, Npad = w_conv.shape
    Cpad = w_lin.shape[1]

    # Explicit VMEM budget: double-buffered blocks + im2col scratch + temporaries.
    est = (2 * (b_tile * Lalloc * WD * 2            # x block (double-buffered)
                + b_tile * Cpad * 4                 # out block
                + KW * Npad * 2 + Npad * 4          # conv weight / bias
                + Npad * Cpad * 2 + Cpad * 4)       # linear weight / bias
           + b_tile * Lchunk * KW * 2               # im2col scratch
           + 3 * b_tile * Lchunk * Npad * 4         # conv-out / mask temporaries
           + 2 * b_tile * Npad * 4)                 # running max / feat
    vmem_limit = int(min(max(est + (4 << 20), 32 << 20), 64 << 20))

    kernel = functools.partial(_textcnn_fused_kernel,
                               Kmax=Kmax, WD=WD, Lout=Lout, Lchunk=Lchunk)
    return pl.pallas_call(
        kernel,
        out_shape=jax.ShapeDtypeStruct((Bp, Cpad), jnp.float32),
        grid_spec=pltpu.PrefetchScalarGridSpec(
            num_scalar_prefetch=0,
            grid=(Bp // b_tile,),
            in_specs=[
                pl.BlockSpec((b_tile, Lalloc, WD), lambda i: (i, 0, 0)),
                pl.BlockSpec((KW, Npad), lambda i: (0, 0)),
                pl.BlockSpec((1, Npad), lambda i: (0, 0)),
                pl.BlockSpec((Npad, Cpad), lambda i: (0, 0)),
                pl.BlockSpec((1, Cpad), lambda i: (0, 0)),
            ],
            out_specs=pl.BlockSpec((b_tile, Cpad), lambda i: (i, 0)),
            scratch_shapes=[pltpu.VMEM((b_tile * Lchunk, KW), w_conv.dtype)],
        ),
        compiler_params=pltpu.CompilerParams(
            dimension_semantics=("parallel",),      # batch tiles shard across TensorCores
            vmem_limit_bytes=vmem_limit,
        ),
    )(x, w_conv, b_conv, w_lin, b_lin)


# ---------------------------------------------------------------------------
# JAX glue: fused (padded-id) embedding gather, tile sizing, batch pad
# ---------------------------------------------------------------------------
def textcnn_forward(params, text, mask=None, *, b_tile=256, l_chunk=256):
    emb = params["embedding"]                       # (WN, WD) f32
    WD = emb.shape[1]
    Kmax = params["kmax"]
    mp = params["max_pad"]
    C = params["num_classes"]
    KW, Npad = params["w_conv"].shape
    B, L = text.shape

    Lpad = L + 2 * mp                               # Conv1d(padding=K//2) frame (shared Kmax)
    Lout = Lpad - Kmax + 1
    Lchunk = _round_up(min(l_chunk, Lout), 8)       # streamed-pool chunk (multiple of 8)
    n_chunks = -(-Lout // Lchunk)
    Lalloc = n_chunks * Lchunk + Kmax - 1           # >= Lpad; extra rows are zero + masked

    # Batch tile: as large as the VMEM budget allows; keep >=2 grid steps when the
    # batch allows so the parallel axis spans both v7x TensorCores.
    Bp8 = _round_up(B, 8)
    bt = min(_round_up(b_tile, 8), Bp8)
    if Bp8 >= 16 and Bp8 < 2 * bt:
        bt = _round_up((Bp8 + 1) // 2, 8)

    def _vmem_need(btile):
        return (2 * btile * Lalloc * WD * 2         # double-buffered x block
                + btile * Lchunk * KW * 2           # im2col scratch
                + 3 * btile * Lchunk * Npad * 4)    # conv-out temporaries
    budget = 40 << 20                               # conservative vs v7x's 64 MiB physical
    while bt > 8 and _vmem_need(bt) > budget:
        bt = max(8, _round_up(bt // 2, 8))
    Bp = _round_up(B, bt)

    # Fused gather + padding: pad the token ids (id 0) and a validity mask, gather once.
    ids = jnp.pad(text, ((0, Bp - B), (mp, Lalloc - mp - L)))
    valid = jnp.ones((B, L), jnp.float32) if mask is None else mask.astype(jnp.float32)
    valid = jnp.pad(valid, ((0, Bp - B), (mp, Lalloc - mp - L)))
    x = (emb[ids] * valid[..., None]).astype(params["w_conv"].dtype)   # (Bp, Lalloc, WD) bf16
    # TODO(synk): fully fuse the embedding gather into the kernel (scalar-prefetched ids
    # + in-kernel row DMA) to avoid this HBM materialization of the activation.
    # TODO(synk): nn.Dropout(0.1) is the identity here (eval-mode semantics).

    out = _textcnn_fused_call(x, params["w_conv"], params["b_conv"],
                              params["w_lin"], params["b_lin"],
                              b_tile=bt, Kmax=Kmax, Lout=Lout, Lchunk=Lchunk)
    return out[:B, :C]                              # drop batch / class padding


# ---------------------------------------------------------------------------
# Parameter construction (PyTorch layouts packed into the fused layout)
# ---------------------------------------------------------------------------
def init_params(key, WN, WD, KN, KS, C, mm_dtype=jnp.bfloat16):
    keys = jax.random.split(key, 2 * len(KS) + 3)
    it = iter(keys)

    embedding = 0.1 * jax.random.normal(next(it), (WN, WD), jnp.float32)

    Kmax = max(KS)
    max_pad = max(K // 2 for K in KS)
    # All branches must share one output length for the fused (shared-Lout) formulation.
    assert len({2 * (K // 2) - K + 1 for K in KS}) == 1, "mixed odd/even kernel sizes"
    # TODO(synk): support mixed odd/even kernel widths (different Lout per branch).

    F = len(KS) * KN
    Npad = _round_up(F, 128)                 # lane-dense conv-output-channel dim
    Cpad = _round_up(C, 128)                 # lane-dense logits (unmasked stores)

    w_conv = jnp.zeros((Kmax, WD, Npad), jnp.float32)
    b_conv = jnp.zeros((1, Npad), jnp.float32)
    ref_convs = []
    for j, K in enumerate(KS):
        w = 0.1 * jax.random.normal(next(it), (KN, WD, K), jnp.float32)   # torch Conv1d layout
        b = 0.1 * jax.random.normal(next(it), (KN,), jnp.float32)
        off = max_pad - K // 2
        # W_comb[off + k, c, j*KN + o] = w[o, c, k]  (shorter widths = zero taps)
        w_conv = w_conv.at[off:off + K, :, j * KN:(j + 1) * KN].set(
            jnp.transpose(w, (2, 1, 0)))
        b_conv = b_conv.at[0, j * KN:(j + 1) * KN].set(b)
        ref_convs.append((K, w, b))

    lin_w = 0.1 * jax.random.normal(next(it), (C, F), jnp.float32)        # torch Linear layout
    lin_b = 0.1 * jax.random.normal(next(it), (C,), jnp.float32)
    w_lin = jnp.zeros((Npad, Cpad), jnp.float32).at[:F, :C].set(lin_w.T)
    b_lin = jnp.zeros((1, Cpad), jnp.float32).at[0, :C].set(lin_b)

    return {
        "embedding": embedding,
        # im2col row order: row k*WD + c holds tap k, input channel c
        "w_conv": w_conv.reshape(Kmax * WD, Npad).astype(mm_dtype),
        "b_conv": b_conv,                       # f32, added after the pool
        "w_lin": w_lin.astype(mm_dtype),
        "b_lin": b_lin,                         # f32
        "kmax": Kmax,
        "max_pad": max_pad,
        "num_classes": C,
        # pure-JAX reference weights (PyTorch layouts), for validation only
        "_ref_convs": ref_convs,
        "_ref_linear": (lin_w, lin_b),
    }


# ---------------------------------------------------------------------------
# Pure-JAX reference (PyTorch-style per-branch conv) for validation
# ---------------------------------------------------------------------------
def _reference_forward(params, text, mask=None):
    mm_dt = params["w_conv"].dtype
    emb = params["embedding"][text]
    if mask is not None:
        emb = emb * mask[..., None].astype(emb.dtype)
    x = emb.astype(mm_dt).astype(jnp.float32)                 # mirror kernel's bf16 rounding
    B, L, WD = x.shape
    pooled = []
    for (K, w, b) in params["_ref_convs"]:
        wf = w.astype(mm_dt).astype(jnp.float32)              # (KN, WD, K)
        p = K // 2
        xp = jnp.pad(x, ((0, 0), (p, p), (0, 0)))
        Lout = L + 2 * p - K + 1
        y = jnp.zeros((B, Lout, w.shape[0]), jnp.float32)
        for k in range(K):
            y = y + jnp.einsum("bld,od->blo", xp[:, k:k + Lout, :], wf[:, :, k])
        y = jnp.maximum(y + b[None, None, :], 0.0)            # PyTorch order: bias+ReLU then pool
        pooled.append(jnp.max(y, axis=1))
    feat = jnp.concatenate(pooled, axis=-1)                   # (B, F)
    lin_w, lin_b = params["_ref_linear"]
    wl = lin_w.astype(mm_dt).astype(jnp.float32)
    featc = feat.astype(mm_dt).astype(jnp.float32)
    return featc @ wl.T + lin_b[None, :]


if __name__ == "__main__":
    # Small shapes consistent with the module.
    WN, WD = 50, 32        # vocab size, embedding dim
    KN = 8                 # kernel_num
    KS = (3, 5)            # kernel_sizes
    C = 4                  # num_classes
    B, L = 2, 16           # batch, sequence length

    key = jax.random.PRNGKey(0)
    k_param, k_text, k_text2 = jax.random.split(key, 3)

    params = init_params(k_param, WN, WD, KN, KS, C)
    text = jax.random.randint(k_text, (B, L), 0, WN, dtype=jnp.int32)

    out = textcnn_forward(params, text, mask=None)            # (B, C), single-chunk path
    jax.block_until_ready(out)
    assert out.shape == (B, C) and out.dtype == jnp.float32
    ref = _reference_forward(params, text, mask=None)
    err = float(jnp.max(jnp.abs(out - ref)))
    assert err < 2e-3, f"kernel/reference mismatch (single-chunk): {err}"

    # Second check: multi-grid-step batch + streamed chunks + ragged-tail masking.
    B2, L2 = 20, 23
    text2 = jax.random.randint(k_text2, (B2, L2), 0, WN, dtype=jnp.int32)
    out2 = textcnn_forward(params, text2, mask=None, b_tile=8, l_chunk=8)
    jax.block_until_ready(out2)
    ref2 = _reference_forward(params, text2, mask=None)
    err2 = float(jnp.max(jnp.abs(out2 - ref2)))
    assert err2 < 2e-3, f"kernel/reference mismatch (chunked): {err2}"

    print("KERNEL_OK")
</pallas_src>

<mosaic_0001>
module attributes {stable_mosaic.version = 11 : i64} {
  func.func @_textcnn_fused_kernel(%arg0: i32, %arg1: memref<8x20x32xbf16, #tpu.memory_space<vmem>>, %arg2: memref<160x128xbf16, #tpu.memory_space<vmem>>, %arg3: memref<1x128xf32, #tpu.memory_space<vmem>>, %arg4: memref<128x128xbf16, #tpu.memory_space<vmem>>, %arg5: memref<1x128xf32, #tpu.memory_space<vmem>>, %arg6: memref<8x128xf32, #tpu.memory_space<vmem>>, %arg7: memref<128x160xbf16, #tpu.memory_space<vmem>>) attributes {dimension_semantics = [#tpu.dimension_semantics<parallel>], iteration_bounds = array<i64: 1>, scalar_prefetch = 0 : i64, scratch_operands = 1 : i64, tpu.core_type = #tpu.core_type<tc>, window_params = [{transform_indices = @transform_0, window_bounds = array<i64: 8, 20, 32>}, {pipeline_mode = #tpu.pipeline_mode<synchronous>, transform_indices = @transform_1, window_bounds = array<i64: 160, 128>}, {pipeline_mode = #tpu.pipeline_mode<synchronous>, transform_indices = @transform_2, window_bounds = array<i64: 1, 128>}, {pipeline_mode = #tpu.pipeline_mode<synchronous>, transform_indices = @transform_3, window_bounds = array<i64: 128, 128>}, {pipeline_mode = #tpu.pipeline_mode<synchronous>, transform_indices = @transform_4, window_bounds = array<i64: 1, 128>}, {transform_indices = @transform_5, window_bounds = array<i64: 8, 128>}]} {
    %c0 = arith.constant 0 : index
    %c0_0 = arith.constant 0 : index
    %0 = vector.load %arg2[%c0, %c0_0] : memref<160x128xbf16, #tpu.memory_space<vmem>>, vector<160x128xbf16>
    %c0_1 = arith.constant 0 : index
    %c0_2 = arith.constant 0 : index
    %c0_3 = arith.constant 0 : index
    %1 = vector.load %arg1[%c0_1, %c0_2, %c0_3] : memref<8x20x32xbf16, #tpu.memory_space<vmem>>, vector<8x16x32xbf16>
    %2 = vector.shape_cast %1 : vector<8x16x32xbf16> to vector<128x32xbf16>
    %c0_4 = arith.constant 0 : index
    %c0_5 = arith.constant 0 : index
    %3 = vector.load %arg7[%c0_4, %c0_5] : memref<128x160xbf16, #tpu.memory_space<vmem>>, vector<128x32xbf16>
    tpu.vector_store %arg7[%c0_4, %c0_5], %2 {strides = array<i32>} : memref<128x160xbf16, #tpu.memory_space<vmem>>, vector<128x32xbf16>,
    %c0_6 = arith.constant 0 : index
    %c1 = arith.constant 1 : index
    %c0_7 = arith.constant 0 : index
    %4 = vector.load %arg1[%c0_6, %c1, %c0_7] : memref<8x20x32xbf16, #tpu.memory_space<vmem>>, vector<8x16x32xbf16>
    %5 = vector.shape_cast %4 : vector<8x16x32xbf16> to vector<128x32xbf16>
    %c0_8 = arith.constant 0 : index
    %c32 = arith.constant 32 : index
    %6 = vector.load %arg7[%c0_8, %c32] : memref<128x160xbf16, #tpu.memory_space<vmem>>, vector<128x32xbf16>
    tpu.vector_store %arg7[%c0_8, %c32], %5 {strides = array<i32>} : memref<128x160xbf16, #tpu.memory_space<vmem>>, vector<128x32xbf16>,
    %c0_9 = arith.constant 0 : index
    %c2 = arith.constant 2 : index
    %c0_10 = arith.constant 0 : index
    %7 = vector.load %arg1[%c0_9, %c2, %c0_10] : memref<8x20x32xbf16, #tpu.memory_space<vmem>>, vector<8x16x32xbf16>
    %8 = vector.shape_cast %7 : vector<8x16x32xbf16> to vector<128x32xbf16>
    %c0_11 = arith.constant 0 : index
    %c64 = arith.constant 64 : index
    %9 = vector.load %arg7[%c0_11, %c64] : memref<128x160xbf16, #tpu.memory_space<vmem>>, vector<128x32xbf16>
    tpu.vector_store %arg7[%c0_11, %c64], %8 {strides = array<i32>} : memref<128x160xbf16, #tpu.memory_space<vmem>>, vector<128x32xbf16>,
    %c0_12 = arith.constant 0 : index
    %c3 = arith.constant 3 : index
    %c0_13 = arith.constant 0 : index
    %10 = vector.load %arg1[%c0_12, %c3, %c0_13] : memref<8x20x32xbf16, #tpu.memory_space<vmem>>, vector<8x16x32xbf16>
    %11 = vector.shape_cast %10 : vector<8x16x32xbf16> to vector<128x32xbf16>
    %c0_14 = arith.constant 0 : index
    %c96 = arith.constant 96 : index
    %12 = vector.load %arg7[%c0_14, %c96] : memref<128x160xbf16, #tpu.memory_space<vmem>>, vector<128x32xbf16>
    tpu.vector_store %arg7[%c0_14, %c96], %11 {strides = array<i32>} : memref<128x160xbf16, #tpu.memory_space<vmem>>, vector<128x32xbf16>,
    %c0_15 = arith.constant 0 : index
    %c4 = arith.constant 4 : index
    %c0_16 = arith.constant 0 : index
    %13 = vector.load %arg1[%c0_15, %c4, %c0_16] : memref<8x20x32xbf16, #tpu.memory_space<vmem>>, vector<8x16x32xbf16>
    %14 = vector.shape_cast %13 : vector<8x16x32xbf16> to vector<128x32xbf16>
    %c0_17 = arith.constant 0 : index
    %c128 = arith.constant 128 : index
    %15 = vector.load %arg7[%c0_17, %c128] : memref<128x160xbf16, #tpu.memory_space<vmem>>, vector<128x32xbf16>
    tpu.vector_store %arg7[%c0_17, %c128], %14 {strides = array<i32>} : memref<128x160xbf16, #tpu.memory_space<vmem>>, vector<128x32xbf16>,
    %c0_18 = arith.constant 0 : index
    %c0_19 = arith.constant 0 : index
    %16 = vector.load %arg7[%c0_18, %c0_19] : memref<128x160xbf16, #tpu.memory_space<vmem>>, vector<128x160xbf16>
    %cst = arith.constant dense<0.000000e+00> : vector<128x128xf32>
    %17 = tpu.matmul %16, %0, %cst {dimension_numbers = #tpu.dot_dimension_numbers<[1], [0], [0], [1], [0, 0, 1, 1], [], []>} : vector<128x160xbf16>, vector<160x128xbf16>, vector<128x128xf32> -> vector<128x128xf32>
    %18 = vector.shape_cast %17 : vector<128x128xf32> to vector<8x16x128xf32>
    %cst_20 = arith.constant dense<0xFF800000> : vector<8x128xf32>
    %19 = vector.multi_reduction <maximumf>, %18, %cst_20 [1] : vector<8x16x128xf32> to vector<8x128xf32>
    %c0_21 = arith.constant 0 : index
    %c0_22 = arith.constant 0 : index
    %20 = vector.load %arg3[%c0_21, %c0_22] : memref<1x128xf32, #tpu.memory_space<vmem>>, vector<1x128xf32>
    %21 = vector.broadcast %20 : vector<1x128xf32> to vector<8x128xf32>
    %22 = arith.addf %19, %21 : vector<8x128xf32>
    %cst_23 = arith.constant 0.000000e+00 : f32
    %23 = vector.broadcast %cst_23 : f32 to vector<8x128xf32>
    %24 = arith.maximumf %22, %23 : vector<8x128xf32>
    %25 = arith.truncf %24 : vector<8x128xf32> to vector<8x128xbf16>
    %c0_24 = arith.constant 0 : index
    %c0_25 = arith.constant 0 : index
    %26 = vector.load %arg4[%c0_24, %c0_25] : memref<128x128xbf16, #tpu.memory_space<vmem>>, vector<128x128xbf16>
    %cst_26 = arith.constant dense<0.000000e+00> : vector<8x128xf32>
    %27 = tpu.matmul %25, %26, %cst_26 {dimension_numbers = #tpu.dot_dimension_numbers<[1], [0], [0], [1], [0, 0, 1, 1], [], []>} : vector<8x128xbf16>, vector<128x128xbf16>, vector<8x128xf32> -> vector<8x128xf32>
    %c0_27 = arith.constant 0 : index
    %c0_28 = arith.constant 0 : index
    %28 = vector.load %arg5[%c0_27, %c0_28] : memref<1x128xf32, #tpu.memory_space<vmem>>, vector<1x128xf32>
    %29 = vector.broadcast %28 : vector<1x128xf32> to vector<8x128xf32>
    %30 = arith.addf %27, %29 : vector<8x128xf32>
    %c0_29 = arith.constant 0 : index
    %c0_30 = arith.constant 0 : index
    %31 = vector.load %arg6[%c0_29, %c0_30] : memref<8x128xf32, #tpu.memory_space<vmem>>, vector<8x128xf32>
    tpu.vector_store %arg6[%c0_29, %c0_30], %30 {strides = array<i32>} : memref<8x128xf32, #tpu.memory_space<vmem>>, vector<8x128xf32>,
    return
  }
  func.func @transform_0(%arg0: i32) -> (i32, i32, i32) {
    %c0_i32 = arith.constant 0 : i32
    %c0_i32_0 = arith.constant 0 : i32
    %c0_i32_1 = arith.constant 0 : i32
    return %arg0, %c0_i32, %c0_i32_0 : i32, i32, i32
  }
  func.func @transform_1(%arg0: i32) -> (i32, i32) {
    %c0_i32 = arith.constant 0 : i32
    %c0_i32_0 = arith.constant 0 : i32
    %c0_i32_1 = arith.constant 0 : i32
    return %c0_i32, %c0_i32_0 : i32, i32
  }
  func.func @transform_2(%arg0: i32) -> (i32, i32) {
    %c0_i32 = arith.constant 0 : i32
    %c0_i32_0 = arith.constant 0 : i32
    %c0_i32_1 = arith.constant 0 : i32
    return %c0_i32, %c0_i32_0 : i32, i32
  }
  func.func @transform_3(%arg0: i32) -> (i32, i32) {
    %c0_i32 = arith.constant 0 : i32
    %c0_i32_0 = arith.constant 0 : i32
    %c0_i32_1 = arith.constant 0 : i32
    return %c0_i32, %c0_i32_0 : i32, i32
  }
  func.func @transform_4(%arg0: i32) -> (i32, i32) {
    %c0_i32 = arith.constant 0 : i32
    %c0_i32_0 = arith.constant 0 : i32
    %c0_i32_1 = arith.constant 0 : i32
    return %c0_i32, %c0_i32_0 : i32, i32
  }
  func.func @transform_5(%arg0: i32) -> (i32, i32) {
    %c0_i32 = arith.constant 0 : i32
    %c0_i32_0 = arith.constant 0 : i32
    return %arg0, %c0_i32 : i32, i32
  }
}

</mosaic_0001>

<llo_original>
// kernel: tpu_custom_call.1
$region0: #{tpu_custom_call.1}
  #allocation0 [shape = 'u32[]', space=smem, size = 0x4, offset = 0x4, fixed_abs, tag = 'smem constant byte address 0x4 - core index']
  #allocation1 [shape = 'u32[72,128]{1,0:T(1,128)}', space=vmem, size = 0x9000, scoped, tag = 'internal scratch']
  #allocation2 [shape = 'bf16[128,160]{1,0:T(8,128)(2,1)}', space=vmem, size = 0x10000, scoped, tag = 'scratch operand']
  %s0 = inlined_call_operand.vmem [shape: bf16[8,20,32], index: 0, kind: input, shape index: {}]
  %s1 = inlined_call_operand.vmem [shape: bf16[160,128], index: 1, kind: input, shape index: {}]
  %s2 = inlined_call_operand.vmem [shape: f32[1,128], index: 2, kind: input, shape index: {}]
  %s3 = inlined_call_operand.vmem [shape: bf16[128,128], index: 3, kind: input, shape index: {}]
  %s4 = inlined_call_operand.vmem [shape: f32[1,128], index: 4, kind: input, shape index: {}]
  %s5 = inlined_call_operand.hbm [shape: f32[8,128], index: 5, kind: output, shape index: {}]
  %s6 = sld [smem:[#allocation0]]
  $region30: #{tpu_custom_call.1} parent=0
    _
  %s8 = ssub.s32 1, %s6
  %s9 = scalar_select 0, %s8, %s6
  $region1: #{tpu_custom_call.1} parent=0
    #allocation3 [shape = 'u8[4096]{0}', space=vmem, size = 0x1000, scoped, tag = 'output window, operand 0, single buffered']
    #allocation4 [shape = 's32[1]{0}', space=sflag, size = 0x4, scoped, tag = 'scoped memory for tpu_custom_call.1']
    %10 = vsyncpa [#allocation4], 0
    // Predicated region
    $region2: #{tpu_custom_call.1} parent=1 // pred_check
      _
    $region3: #{tpu_custom_call.1} parent=1 // pred_check_branch
      %12 = sbr.rel (0) target = $region5
    $region4: #{tpu_custom_call.1} parent=1 // pred_region
      _
    $region5: #{tpu_custom_call.1} parent=1 // pred_fallthru
      _
    // Predicated region
    $region6: #{tpu_custom_call.1} parent=1 // pred_check
      _
    $region7: #{tpu_custom_call.1} parent=1 // pred_check_branch
      %14 = sbr.rel (0) target = $region9
    $region8: #{tpu_custom_call.1} parent=1 // pred_region
      _
    $region9: #{tpu_custom_call.1} parent=1 // pred_fallthru
      _
    // Predicated region
    $region10: #{tpu_custom_call.1} parent=1 // pred_check
      _
    $region11: #{tpu_custom_call.1} parent=1 // pred_check_branch
      %16 = sbr.rel (0) target = $region13
    $region12: #{tpu_custom_call.1} parent=1 // pred_region
      _
    $region13: #{tpu_custom_call.1} parent=1 // pred_fallthru
      _
    // Predicated region
    $region14: #{tpu_custom_call.1} parent=1 // pred_check
      _
    $region15: #{tpu_custom_call.1} parent=1 // pred_check_branch
      %18 = sbr.rel (0) target = $region17
    $region16: #{tpu_custom_call.1} parent=1 // pred_region
      _
    $region17: #{tpu_custom_call.1} parent=1 // pred_fallthru
      _
    // Predicated region
    $region18: #{tpu_custom_call.1} parent=1 // pred_check
      _
    $region19: #{tpu_custom_call.1} parent=1 // pred_check_branch
      %20 = sbr.rel (0) target = $region21
    $region20: #{tpu_custom_call.1} parent=1 // pred_region
      _
    $region21: #{tpu_custom_call.1} parent=1 // pred_fallthru
      _
    %v22 = vld [vmem:[%s1] sm:$0xf]
    %v23 = vld [vmem:[%s1 + $0x4] sm:$0xf]
    %v24 = vld [vmem:[%s1 + $0x8] sm:$0xf]
    %v25 = vld [vmem:[%s1 + $0xc] sm:$0xf]
    %v26 = vld [vmem:[%s1 + $0x10] sm:$0xf]
    %v27 = vld [vmem:[%s1 + $0x14] sm:$0xf]
    %v28 = vld [vmem:[%s1 + $0x18] sm:$0xf]
    %v29 = vld [vmem:[%s1 + $0x1c] sm:$0xf]
    %v30 = vld [vmem:[%s1 + $0x20] sm:$0xf]
    %v31 = vld [vmem:[%s1 + $0x24] sm:$0xf]
    %v32 = vld [vmem:[%s1 + $0x28] sm:$0xf]
    %v33 = vld [vmem:[%s1 + $0x2c] sm:$0xf]
    %v34 = vld [vmem:[%s1 + $0x30] sm:$0xf]
    %v35 = vld [vmem:[%s1 + $0x34] sm:$0xf]
    %v36 = vld [vmem:[%s1 + $0x38] sm:$0xf]
    %v37 = vld [vmem:[%s1 + $0x3c] sm:$0xf]
    %v38 = vld [vmem:[%s1 + $0x40] sm:$0xf]
    %v39 = vld [vmem:[%s1 + $0x44] sm:$0xf]
    %v40 = vld [vmem:[%s1 + $0x48] sm:$0xf]
    %v41 = vld [vmem:[%s1 + $0x4c] sm:$0xf]
    %v42 = vld [vmem:[%s0] sm:$0xf]
    %v43 = vld [vmem:[%s0 + $0x4] sm:$0xf]
    %v44 = vld [vmem:[%s0 + $0xc] sm:$0xf]
    %v45 = vld [vmem:[%s0 + $0x10] sm:$0xf]
    %v46 = vld [vmem:[%s0 + $0x18] sm:$0xf]
    %v47 = vld [vmem:[%s0 + $0x1c] sm:$0xf]
    %v48 = vld [vmem:[%s0 + $0x24] sm:$0xf]
    %v49 = vld [vmem:[%s0 + $0x28] sm:$0xf]
    %v50 = vld [vmem:[%s0 + $0x30] sm:$0xf]
    %v51 = vld [vmem:[%s0 + $0x34] sm:$0xf]
    %v52 = vld [vmem:[%s0 + $0x3c] sm:$0xf]
    %v53 = vld [vmem:[%s0 + $0x40] sm:$0xf]
    %v54 = vld [vmem:[%s0 + $0x48] sm:$0xf]
    %v55 = vld [vmem:[%s0 + $0x4c] sm:$0xf]
    %v56 = vld [vmem:[%s0 + $0x54] sm:$0xf]
    %v57 = vld [vmem:[%s0 + $0x58] sm:$0xf]
    %vm58 = vcmask 257024
    %59 = vst.msk [vmem:[#allocation2] sm:$0xf] %vm58, %v42
    %60 = vst.msk [vmem:[#allocation2 + $0x8] sm:$0xf] %vm58, %v43
    %61 = vst.msk [vmem:[#allocation2 + $0x10] sm:$0xf] %vm58, %v44
    %62 = vst.msk [vmem:[#allocation2 + $0x18] sm:$0xf] %vm58, %v45
    %63 = vst.msk [vmem:[#allocation2 + $0x20] sm:$0xf] %vm58, %v46
    %64 = vst.msk [vmem:[#allocation2 + $0x28] sm:$0xf] %vm58, %v47
    %65 = vst.msk [vmem:[#allocation2 + $0x30] sm:$0xf] %vm58, %v48
    %66 = vst.msk [vmem:[#allocation2 + $0x38] sm:$0xf] %vm58, %v49
    %67 = vst.msk [vmem:[#allocation2 + $0x40] sm:$0xf] %vm58, %v50
    %68 = vst.msk [vmem:[#allocation2 + $0x48] sm:$0xf] %vm58, %v51
    %69 = vst.msk [vmem:[#allocation2 + $0x50] sm:$0xf] %vm58, %v52
    %70 = vst.msk [vmem:[#allocation2 + $0x58] sm:$0xf] %vm58, %v53
    %71 = vst.msk [vmem:[#allocation2 + $0x60] sm:$0xf] %vm58, %v54
    %72 = vst.msk [vmem:[#allocation2 + $0x68] sm:$0xf] %vm58, %v55
    %73 = vst.msk [vmem:[#allocation2 + $0x70] sm:$0xf] %vm58, %v56
    %74 = vst.msk [vmem:[#allocation2 + $0x78] sm:$0xf] %vm58, %v57
    %v75 = vld [vmem:[%s0] sm:$0xf]
    %v76 = vld [vmem:[%s0 + $0x4] sm:$0xf]
    %v77 = vld [vmem:[%s0 + $0x8] sm:$0x1]
    %v78 = vld [vmem:[%s0 + $0xc] sm:$0xf]
    %v79 = vld [vmem:[%s0 + $0x10] sm:$0xf]
    %v80 = vld [vmem:[%s0 + $0x14] sm:$0x1]
    %v81 = vld [vmem:[%s0 + $0x18] sm:$0xf]
    %v82 = vld [vmem:[%s0 + $0x1c] sm:$0xf]
    %v83 = vld [vmem:[%s0 + $0x20] sm:$0x1]
    %v84 = vld [vmem:[%s0 + $0x24] sm:$0xf]
    %v85 = vld [vmem:[%s0 + $0x28] sm:$0xf]
    %v86 = vld [vmem:[%s0 + $0x2c] sm:$0x1]
    %v87 = vld [vmem:[%s0 + $0x30] sm:$0xf]
    %v88 = vld [vmem:[%s0 + $0x34] sm:$0xf]
    %v89 = vld [vmem:[%s0 + $0x38] sm:$0x1]
    %v90 = vld [vmem:[%s0 + $0x3c] sm:$0xf]
    %v91 = vld [vmem:[%s0 + $0x40] sm:$0xf]
    %v92 = vld [vmem:[%s0 + $0x44] sm:$0x1]
    %v93 = vld [vmem:[%s0 + $0x48] sm:$0xf]
    %v94 = vld [vmem:[%s0 + $0x4c] sm:$0xf]
    %v95 = vld [vmem:[%s0 + $0x50] sm:$0x1]
    %v96 = vld [vmem:[%s0 + $0x54] sm:$0xf]
    %v97 = vld [vmem:[%s0 + $0x58] sm:$0xf]
    %v98 = vld [vmem:[%s0 + $0x5c] sm:$0x1]
    %vm99 = vsmask.f32 3328
    %vm100 = vsmask.f32 7440
    %vm101 = vmor %vm99, %vm100
    %v103 = vshrl.u32 %v75, 16
    %v105 = vrot.slane %v103, 4
    %v106 = vshll.u32 %v75, 16
    %v108 = vrot.slane %v106, 5
    %v109 = vor.u32 %v105, %v108
    %v110 = vrot.slane %v109, 4
    %v112 = vshll.u32 %v76, 16
    %v114 = vrot.slane %v112, 5
    %v115 = vsel %vm101, %v110, %v114
    %v116 = vshrl.u32 %v76, 16
    %v118 = vrot.slane %v116, 4
    %v119 = vor.u32 %v118, %v114
    %v120 = vrot.slane %v119, 4
    %v122 = vshll.u32 %v77, 16
    %v124 = vrot.slane %v122, 5
    %v125 = vsel %vm101, %v120, %v124
    %v127 = vshrl.u32 %v78, 16
    %v129 = vrot.slane %v127, 4
    %v130 = vshll.u32 %v78, 16
    %v132 = vrot.slane %v130, 5
    %v133 = vor.u32 %v129, %v132
    %v134 = vrot.slane %v133, 4
    %v136 = vshll.u32 %v79, 16
    %v138 = vrot.slane %v136, 5
    %v139 = vsel %vm101, %v134, %v138
    %v140 = vshrl.u32 %v79, 16
    %v142 = vrot.slane %v140, 4
    %v143 = vor.u32 %v142, %v138
    %v144 = vrot.slane %v143, 4
    %v146 = vshll.u32 %v80, 16
    %v148 = vrot.slane %v146, 5
    %v149 = vsel %vm101, %v144, %v148
    %v151 = vshrl.u32 %v81, 16
    %v153 = vrot.slane %v151, 4
    %v154 = vshll.u32 %v81, 16
    %v156 = vrot.slane %v154, 5
    %v157 = vor.u32 %v153, %v156
    %v158 = vrot.slane %v157, 4
    %v160 = vshll.u32 %v82, 16
    %v162 = vrot.slane %v160, 5
    %v163 = vsel %vm101, %v158, %v162
    %v164 = vshrl.u32 %v82, 16
    %v166 = vrot.slane %v164, 4
    %v167 = vor.u32 %v166, %v162
    %v168 = vrot.slane %v167, 4
    %v170 = vshll.u32 %v83, 16
    %v172 = vrot.slane %v170, 5
    %v173 = vsel %vm101, %v168, %v172
    %v175 = vshrl.u32 %v84, 16
    %v177 = vrot.slane %v175, 4
    %v178 = vshll.u32 %v84, 16
    %v180 = vrot.slane %v178, 5
    %v181 = vor.u32 %v177, %v180
    %v182 = vrot.slane %v181, 4
    %v184 = vshll.u32 %v85, 16
    %v186 = vrot.slane %v184, 5
    %v187 = vsel %vm101, %v182, %v186
    %v188 = vshrl.u32 %v85, 16
    %v190 = vrot.slane %v188, 4
    %v191 = vor.u32 %v190, %v186
    %v192 = vrot.slane %v191, 4
    %v194 = vshll.u32 %v86, 16
    %v196 = vrot.slane %v194, 5
    %v197 = vsel %vm101, %v192, %v196
    %v199 = vshrl.u32 %v87, 16
    %v201 = vrot.slane %v199, 4
    %v202 = vshll.u32 %v87, 16
    %v204 = vrot.slane %v202, 5
    %v205 = vor.u32 %v201, %v204
    %v206 = vrot.slane %v205, 4
    %v208 = vshll.u32 %v88, 16
    %v210 = vrot.slane %v208, 5
    %v211 = vsel %vm101, %v206, %v210
    %v212 = vshrl.u32 %v88, 16
    %v214 = vrot.slane %v212, 4
    %v215 = vor.u32 %v214, %v210
    %v216 = vrot.slane %v215, 4
    %v218 = vshll.u32 %v89, 16
    %v220 = vrot.slane %v218, 5
    %v221 = vsel %vm101, %v216, %v220
    %v223 = vshrl.u32 %v90, 16
    %v225 = vrot.slane %v223, 4
    %v226 = vshll.u32 %v90, 16
    %v228 = vrot.slane %v226, 5
    %v229 = vor.u32 %v225, %v228
    %v230 = vrot.slane %v229, 4
    %v232 = vshll.u32 %v91, 16
    %v234 = vrot.slane %v232, 5
    %v235 = vsel %vm101, %v230, %v234
    %v236 = vshrl.u32 %v91, 16
    %v238 = vrot.slane %v236, 4
    %v239 = vor.u32 %v238, %v234
    %v240 = vrot.slane %v239, 4
    %v242 = vshll.u32 %v92, 16
    %v244 = vrot.slane %v242, 5
    %v245 = vsel %vm101, %v240, %v244
    %v247 = vshrl.u32 %v93, 16
    %v249 = vrot.slane %v247, 4
    %v250 = vshll.u32 %v93, 16
    %v252 = vrot.slane %v250, 5
    %v253 = vor.u32 %v249, %v252
    %v254 = vrot.slane %v253, 4
    %v256 = vshll.u32 %v94, 16
    %v258 = vrot.slane %v256, 5
    %v259 = vsel %vm101, %v254, %v258
    %v260 = vshrl.u32 %v94, 16
    %v262 = vrot.slane %v260, 4
    %v263 = vor.u32 %v262, %v258
    %v264 = vrot.slane %v263, 4
    %v266 = vshll.u32 %v95, 16
    %v268 = vrot.slane %v266, 5
    %v269 = vsel %vm101, %v264, %v268
    %v271 = vshrl.u32 %v96, 16
    %v273 = vrot.slane %v271, 4
    %v274 = vshll.u32 %v96, 16
    %v276 = vrot.slane %v274, 5
    %v277 = vor.u32 %v273, %v276
    %v278 = vrot.slane %v277, 4
    %v280 = vshll.u32 %v97, 16
    %v282 = vrot.slane %v280, 5
    %v283 = vsel %vm101, %v278, %v282
    %v284 = vshrl.u32 %v97, 16
    %v286 = vrot.slane %v284, 4
    %v287 = vor.u32 %v286, %v282
    %v288 = vrot.slane %v287, 4
    %v290 = vshll.u32 %v98, 16
    %v292 = vrot.slane %v290, 5
    %v293 = vsel %vm101, %v288, %v292
    %294 = vrot.lane.b32.xlu0 %v115, 32
    %v295 = vpop.permute.xlu0 %294
    %296 = vrot.lane.b32.xlu0 %v125, 32
    %v297 = vpop.permute.xlu0 %296
    %298 = vrot.lane.b32.xlu0 %v139, 32
    %v299 = vpop.permute.xlu0 %298
    %300 = vrot.lane.b32.xlu0 %v149, 32
    %v301 = vpop.permute.xlu0 %300
    %302 = vrot.lane.b32.xlu0 %v163, 32
    %v303 = vpop.permute.xlu0 %302
    %304 = vrot.lane.b32.xlu0 %v173, 32
    %v305 = vpop.permute.xlu0 %304
    %306 = vrot.lane.b32.xlu0 %v187, 32
    %v307 = vpop.permute.xlu0 %306
    %308 = vrot.lane.b32.xlu0 %v197, 32
    %v309 = vpop.permute.xlu0 %308
    %310 = vrot.lane.b32.xlu0 %v211, 32
    %v311 = vpop.permute.xlu0 %310
    %312 = vrot.lane.b32.xlu0 %v221, 32
    %v313 = vpop.permute.xlu0 %312
    %314 = vrot.lane.b32.xlu0 %v235, 32
    %v315 = vpop.permute.xlu0 %314
    %316 = vrot.lane.b32.xlu0 %v245, 32
    %v317 = vpop.permute.xlu0 %316
    %318 = vrot.lane.b32.xlu0 %v259, 32
    %v319 = vpop.permute.xlu0 %318
    %320 = vrot.lane.b32.xlu0 %v269, 32
    %v321 = vpop.permute.xlu0 %320
    %322 = vrot.lane.b32.xlu0 %v283, 32
    %v323 = vpop.permute.xlu0 %322
    %324 = vrot.lane.b32.xlu0 %v293, 32
    %v325 = vpop.permute.xlu0 %324
    %vm342 = vcmask 519424
    %343 = vst.msk [vmem:[#allocation2] sm:$0xf] %vm342, %v295
    %344 = vst.msk [vmem:[#allocation2 + $0x8] sm:$0xf] %vm342, %v297
    %345 = vst.msk [vmem:[#allocation2 + $0x10] sm:$0xf] %vm342, %v299
    %346 = vst.msk [vmem:[#allocation2 + $0x18] sm:$0xf] %vm342, %v301
    %347 = vst.msk [vmem:[#allocation2 + $0x20] sm:$0xf] %vm342, %v303
    %348 = vst.msk [vmem:[#allocation2 + $0x28] sm:$0xf] %vm342, %v305
    %349 = vst.msk [vmem:[#allocation2 + $0x30] sm:$0xf] %vm342, %v307
    %350 = vst.msk [vmem:[#allocation2 + $0x38] sm:$0xf] %vm342, %v309
    %351 = vst.msk [vmem:[#allocation2 + $0x40] sm:$0xf] %vm342, %v311
    %352 = vst.msk [vmem:[#allocation2 + $0x48] sm:$0xf] %vm342, %v313
    %353 = vst.msk [vmem:[#allocation2 + $0x50] sm:$0xf] %vm342, %v315
    %354 = vst.msk [vmem:[#allocation2 + $0x58] sm:$0xf] %vm342, %v317
    %355 = vst.msk [vmem:[#allocation2 + $0x60] sm:$0xf] %vm342, %v319
    %356 = vst.msk [vmem:[#allocation2 + $0x68] sm:$0xf] %vm342, %v321
    %357 = vst.msk [vmem:[#allocation2 + $0x70] sm:$0xf] %vm342, %v323
    %358 = vst.msk [vmem:[#allocation2 + $0x78] sm:$0xf] %vm342, %v325
    %v359 = vld [vmem:[%s0] sm:$0xe]
    %v360 = vld [vmem:[%s0 + $0x4] sm:$0xf]
    %v361 = vld [vmem:[%s0 + $0x8] sm:$0x1]
    %v362 = vld [vmem:[%s0 + $0xc] sm:$0xe]
    %v363 = vld [vmem:[%s0 + $0x10] sm:$0xf]
    %v364 = vld [vmem:[%s0 + $0x14] sm:$0x1]
    %v365 = vld [vmem:[%s0 + $0x18] sm:$0xe]
    %v366 = vld [vmem:[%s0 + $0x1c] sm:$0xf]
    %v367 = vld [vmem:[%s0 + $0x20] sm:$0x1]
    %v368 = vld [vmem:[%s0 + $0x24] sm:$0xe]
    %v369 = vld [vmem:[%s0 + $0x28] sm:$0xf]
    %v370 = vld [vmem:[%s0 + $0x2c] sm:$0x1]
    %v371 = vld [vmem:[%s0 + $0x30] sm:$0xe]
    %v372 = vld [vmem:[%s0 + $0x34] sm:$0xf]
    %v373 = vld [vmem:[%s0 + $0x38] sm:$0x1]
    %v374 = vld [vmem:[%s0 + $0x3c] sm:$0xe]
    %v375 = vld [vmem:[%s0 + $0x40] sm:$0xf]
    %v376 = vld [vmem:[%s0 + $0x44] sm:$0x1]
    %v377 = vld [vmem:[%s0 + $0x48] sm:$0xe]
    %v378 = vld [vmem:[%s0 + $0x4c] sm:$0xf]
    %v379 = vld [vmem:[%s0 + $0x50] sm:$0x1]
    %v380 = vld [vmem:[%s0 + $0x54] sm:$0xe]
    %v381 = vld [vmem:[%s0 + $0x58] sm:$0xf]
    %v382 = vld [vmem:[%s0 + $0x5c] sm:$0x1]
    %vm407 = vcmask 1042432
    %vm408 = vcmask 1046532
    %vm409 = vmor %vm407, %vm408
    %v410 = vrot.slane %v359, 5
    %v411 = vrot.slane %v410, 4
    %v412 = vrot.slane %v360, 5
    %v413 = vsel %vm409, %v411, %v412
    %v414 = vrot.slane %v412, 4
    %v415 = vrot.slane %v361, 5
    %v416 = vsel %vm409, %v414, %v415
    %v417 = vrot.slane %v362, 5
    %v418 = vrot.slane %v417, 4
    %v419 = vrot.slane %v363, 5
    %v420 = vsel %vm409, %v418, %v419
    %v421 = vrot.slane %v419, 4
    %v422 = vrot.slane %v364, 5
    %v423 = vsel %vm409, %v421, %v422
    %v424 = vrot.slane %v365, 5
    %v425 = vrot.slane %v424, 4
    %v426 = vrot.slane %v366, 5
    %v427 = vsel %vm409, %v425, %v426
    %v428 = vrot.slane %v426, 4
    %v429 = vrot.slane %v367, 5
    %v430 = vsel %vm409, %v428, %v429
    %v431 = vrot.slane %v368, 5
    %v432 = vrot.slane %v431, 4
    %v433 = vrot.slane %v369, 5
    %v434 = vsel %vm409, %v432, %v433
    %v435 = vrot.slane %v433, 4
    %v436 = vrot.slane %v370, 5
    %v437 = vsel %vm409, %v435, %v436
    %v438 = vrot.slane %v371, 5
    %v439 = vrot.slane %v438, 4
    %v440 = vrot.slane %v372, 5
    %v441 = vsel %vm409, %v439, %v440
    %v442 = vrot.slane %v440, 4
    %v443 = vrot.slane %v373, 5
    %v444 = vsel %vm409, %v442, %v443
    %v445 = vrot.slane %v374, 5
    %v446 = vrot.slane %v445, 4
    %v447 = vrot.slane %v375, 5
    %v448 = vsel %vm409, %v446, %v447
    %v449 = vrot.slane %v447, 4
    %v450 = vrot.slane %v376, 5
    %v451 = vsel %vm409, %v449, %v450
    %v452 = vrot.slane %v377, 5
    %v453 = vrot.slane %v452, 4
    %v454 = vrot.slane %v378, 5
    %v455 = vsel %vm409, %v453, %v454
    %v456 = vrot.slane %v454, 4
    %v457 = vrot.slane %v379, 5
    %v458 = vsel %vm409, %v456, %v457
    %v459 = vrot.slane %v380, 5
    %v460 = vrot.slane %v459, 4
    %v461 = vrot.slane %v381, 5
    %v462 = vsel %vm409, %v460, %v461
    %v463 = vrot.slane %v461, 4
    %v464 = vrot.slane %v382, 5
    %v465 = vsel %vm409, %v463, %v464
    %466 = vrot.lane.b32.xlu0 %v413, 64
    %v467 = vpop.permute.xlu0 %466
    %468 = vrot.lane.b32.xlu0 %v416, 64
    %v469 = vpop.permute.xlu0 %468
    %470 = vrot.lane.b32.xlu0 %v420, 64
    %v471 = vpop.permute.xlu0 %470
    %472 = vrot.lane.b32.xlu0 %v423, 64
    %v473 = vpop.permute.xlu0 %472
    %474 = vrot.lane.b32.xlu0 %v427, 64
    %v475 = vpop.permute.xlu0 %474
    %476 = vrot.lane.b32.xlu0 %v430, 64
    %v477 = vpop.permute.xlu0 %476
    %478 = vrot.lane.b32.xlu0 %v434, 64
    %v479 = vpop.permute.xlu0 %478
    %480 = vrot.lane.b32.xlu0 %v437, 64
    %v481 = vpop.permute.xlu0 %480
    %482 = vrot.lane.b32.xlu0 %v441, 64
    %v483 = vpop.permute.xlu0 %482
    %484 = vrot.lane.b32.xlu0 %v444, 64
    %v485 = vpop.permute.xlu0 %484
    %486 = vrot.lane.b32.xlu0 %v448, 64
    %v487 = vpop.permute.xlu0 %486
    %488 = vrot.lane.b32.xlu0 %v451, 64
    %v489 = vpop.permute.xlu0 %488
    %490 = vrot.lane.b32.xlu0 %v455, 64
    %v491 = vpop.permute.xlu0 %490
    %492 = vrot.lane.b32.xlu0 %v458, 64
    %v493 = vpop.permute.xlu0 %492
    %494 = vrot.lane.b32.xlu0 %v462, 64
    %v495 = vpop.permute.xlu0 %494
    %496 = vrot.lane.b32.xlu0 %v465, 64
    %v497 = vpop.permute.xlu0 %496
    %vm514 = vcmask 781824
    %515 = vst.msk [vmem:[#allocation2] sm:$0xf] %vm514, %v467
    %516 = vst.msk [vmem:[#allocation2 + $0x8] sm:$0xf] %vm514, %v469
    %517 = vst.msk [vmem:[#allocation2 + $0x10] sm:$0xf] %vm514, %v471
    %518 = vst.msk [vmem:[#allocation2 + $0x18] sm:$0xf] %vm514, %v473
    %519 = vst.msk [vmem:[#allocation2 + $0x20] sm:$0xf] %vm514, %v475
    %520 = vst.msk [vmem:[#allocation2 + $0x28] sm:$0xf] %vm514, %v477
    %521 = vst.msk [vmem:[#allocation2 + $0x30] sm:$0xf] %vm514, %v479
    %522 = vst.msk [vmem:[#allocation2 + $0x38] sm:$0xf] %vm514, %v481
    %523 = vst.msk [vmem:[#allocation2 + $0x40] sm:$0xf] %vm514, %v483
    %524 = vst.msk [vmem:[#allocation2 + $0x48] sm:$0xf] %vm514, %v485
    %525 = vst.msk [vmem:[#allocation2 + $0x50] sm:$0xf] %vm514, %v487
    %526 = vst.msk [vmem:[#allocation2 + $0x58] sm:$0xf] %vm514, %v489
    %527 = vst.msk [vmem:[#allocation2 + $0x60] sm:$0xf] %vm514, %v491
    %528 = vst.msk [vmem:[#allocation2 + $0x68] sm:$0xf] %vm514, %v493
    %529 = vst.msk [vmem:[#allocation2 + $0x70] sm:$0xf] %vm514, %v495
    %530 = vst.msk [vmem:[#allocation2 + $0x78] sm:$0xf] %vm514, %v497
    %v531 = vld [vmem:[%s0] sm:$0xe]
    %v532 = vld [vmem:[%s0 + $0x4] sm:$0xf]
    %v533 = vld [vmem:[%s0 + $0x8] sm:$0x3]
    %v534 = vld [vmem:[%s0 + $0xc] sm:$0xe]
    %v535 = vld [vmem:[%s0 + $0x10] sm:$0xf]
    %v536 = vld [vmem:[%s0 + $0x14] sm:$0x3]
    %v537 = vld [vmem:[%s0 + $0x18] sm:$0xe]
    %v538 = vld [vmem:[%s0 + $0x1c] sm:$0xf]
    %v539 = vld [vmem:[%s0 + $0x20] sm:$0x3]
    %v540 = vld [vmem:[%s0 + $0x24] sm:$0xe]
    %v541 = vld [vmem:[%s0 + $0x28] sm:$0xf]
    %v542 = vld [vmem:[%s0 + $0x2c] sm:$0x3]
    %v543 = vld [vmem:[%s0 + $0x30] sm:$0xe]
    %v544 = vld [vmem:[%s0 + $0x34] sm:$0xf]
    %v545 = vld [vmem:[%s0 + $0x38] sm:$0x3]
    %v546 = vld [vmem:[%s0 + $0x3c] sm:$0xe]
    %v547 = vld [vmem:[%s0 + $0x40] sm:$0xf]
    %v548 = vld [vmem:[%s0 + $0x44] sm:$0x3]
    %v549 = vld [vmem:[%s0 + $0x48] sm:$0xe]
    %v550 = vld [vmem:[%s0 + $0x4c] sm:$0xf]
    %v551 = vld [vmem:[%s0 + $0x50] sm:$0x3]
    %v552 = vld [vmem:[%s0 + $0x54] sm:$0xe]
    %v553 = vld [vmem:[%s0 + $0x58] sm:$0xf]
    %v554 = vld [vmem:[%s0 + $0x5c] sm:$0x3]
    %vm555 = vsmask.f32 2304
    %vm556 = vsmask.f32 6416
    %vm557 = vmor %vm555, %vm556
    %v559 = vshrl.u32 %v531, 16
    %v561 = vrot.slane %v559, 5
    %v562 = vshll.u32 %v531, 16
    %v564 = vrot.slane %v562, 6
    %v565 = vor.u32 %v561, %v564
    %v566 = vrot.slane %v565, 4
    %v568 = vshrl.u32 %v532, 16
    %v570 = vrot.slane %v568, 5
    %v571 = vshll.u32 %v532, 16
    %v573 = vrot.slane %v571, 6
    %v574 = vor.u32 %v570, %v573
    %v575 = vsel %vm557, %v566, %v574
    %v576 = vrot.slane %v574, 4
    %v578 = vshrl.u32 %v533, 16
    %v580 = vrot.slane %v578, 5
    %v581 = vshll.u32 %v533, 16
    %v583 = vrot.slane %v581, 6
    %v584 = vor.u32 %v580, %v583
    %v585 = vsel %vm557, %v576, %v584
    %v587 = vshrl.u32 %v534, 16
    %v589 = vrot.slane %v587, 5
    %v590 = vshll.u32 %v534, 16
    %v592 = vrot.slane %v590, 6
    %v593 = vor.u32 %v589, %v592
    %v594 = vrot.slane %v593, 4
    %v596 = vshrl.u32 %v535, 16
    %v598 = vrot.slane %v596, 5
    %v599 = vshll.u32 %v535, 16
    %v601 = vrot.slane %v599, 6
    %v602 = vor.u32 %v598, %v601
    %v603 = vsel %vm557, %v594, %v602
    %v604 = vrot.slane %v602, 4
    %v606 = vshrl.u32 %v536, 16
    %v608 = vrot.slane %v606, 5
    %v609 = vshll.u32 %v536, 16
    %v611 = vrot.slane %v609, 6
    %v612 = vor.u32 %v608, %v611
    %v613 = vsel %vm557, %v604, %v612
    %v615 = vshrl.u32 %v537, 16
    %v617 = vrot.slane %v615, 5
    %v618 = vshll.u32 %v537, 16
    %v620 = vrot.slane %v618, 6
    %v621 = vor.u32 %v617, %v620
    %v622 = vrot.slane %v621, 4
    %v624 = vshrl.u32 %v538, 16
    %v626 = vrot.slane %v624, 5
    %v627 = vshll.u32 %v538, 16
    %v629 = vrot.slane %v627, 6
    %v630 = vor.u32 %v626, %v629
    %v631 = vsel %vm557, %v622, %v630
    %v632 = vrot.slane %v630, 4
    %v634 = vshrl.u32 %v539, 16
    %v636 = vrot.slane %v634, 5
    %v637 = vshll.u32 %v539, 16
    %v639 = vrot.slane %v637, 6
    %v640 = vor.u32 %v636, %v639
    %v641 = vsel %vm557, %v632, %v640
    %v643 = vshrl.u32 %v540, 16
    %v645 = vrot.slane %v643, 5
    %v646 = vshll.u32 %v540, 16
    %v648 = vrot.slane %v646, 6
    %v649 = vor.u32 %v645, %v648
    %v650 = vrot.slane %v649, 4
    %v652 = vshrl.u32 %v541, 16
    %v654 = vrot.slane %v652, 5
    %v655 = vshll.u32 %v541, 16
    %v657 = vrot.slane %v655, 6
    %v658 = vor.u32 %v654, %v657
    %v659 = vsel %vm557, %v650, %v658
    %v660 = vrot.slane %v658, 4
    %v662 = vshrl.u32 %v542, 16
    %v664 = vrot.slane %v662, 5
    %v665 = vshll.u32 %v542, 16
    %v667 = vrot.slane %v665, 6
    %v668 = vor.u32 %v664, %v667
    %v669 = vsel %vm557, %v660, %v668
    %v671 = vshrl.u32 %v543, 16
    %v673 = vrot.slane %v671, 5
    %v674 = vshll.u32 %v543, 16
    %v676 = vrot.slane %v674, 6
    %v677 = vor.u32 %v673, %v676
    %v678 = vrot.slane %v677, 4
    %v680 = vshrl.u32 %v544, 16
    %v682 = vrot.slane %v680, 5
    %v683 = vshll.u32 %v544, 16
    %v685 = vrot.slane %v683, 6
    %v686 = vor.u32 %v682, %v685
    %v687 = vsel %vm557, %v678, %v686
    %v688 = vrot.slane %v686, 4
    %v690 = vshrl.u32 %v545, 16
    %v692 = vrot.slane %v690, 5
    %v693 = vshll.u32 %v545, 16
    %v695 = vrot.slane %v693, 6
    %v696 = vor.u32 %v692, %v695
    %v697 = vsel %vm557, %v688, %v696
    %v699 = vshrl.u32 %v546, 16
    %v701 = vrot.slane %v699, 5
    %v702 = vshll.u32 %v546, 16
    %v704 = vrot.slane %v702, 6
    %v705 = vor.u32 %v701, %v704
    %v706 = vrot.slane %v705, 4
    %v708 = vshrl.u32 %v547, 16
    %v710 = vrot.slane %v708, 5
    %v711 = vshll.u32 %v547, 16
    %v713 = vrot.slane %v711, 6
    %v714 = vor.u32 %v710, %v713
    %v715 = vsel %vm557, %v706, %v714
    %v716 = vrot.slane %v714, 4
    %v718 = vshrl.u32 %v548, 16
    %v720 = vrot.slane %v718, 5
    %v721 = vshll.u32 %v548, 16
    %v723 = vrot.slane %v721, 6
    %v724 = vor.u32 %v720, %v723
    %v725 = vsel %vm557, %v716, %v724
    %v727 = vshrl.u32 %v549, 16
    %v729 = vrot.slane %v727, 5
    %v730 = vshll.u32 %v549, 16
    %v732 = vrot.slane %v730, 6
    %v733 = vor.u32 %v729, %v732
    %v734 = vrot.slane %v733, 4
    %v736 = vshrl.u32 %v550, 16
    %v738 = vrot.slane %v736, 5
    %v739 = vshll.u32 %v550, 16
    %v741 = vrot.slane %v739, 6
    %v742 = vor.u32 %v738, %v741
    %v743 = vsel %vm557, %v734, %v742
    %v744 = vrot.slane %v742, 4
    %v746 = vshrl.u32 %v551, 16
    %v748 = vrot.slane %v746, 5
    %v749 = vshll.u32 %v551, 16
    %v751 = vrot.slane %v749, 6
    %v752 = vor.u32 %v748, %v751
    %v753 = vsel %vm557, %v744, %v752
    %v755 = vshrl.u32 %v552, 16
    %v757 = vrot.slane %v755, 5
    %v758 = vshll.u32 %v552, 16
    %v760 = vrot.slane %v758, 6
    %v761 = vor.u32 %v757, %v760
    %v762 = vrot.slane %v761, 4
    %v764 = vshrl.u32 %v553, 16
    %v766 = vrot.slane %v764, 5
    %v767 = vshll.u32 %v553, 16
    %v769 = vrot.slane %v767, 6
    %v770 = vor.u32 %v766, %v769
    %v771 = vsel %vm557, %v762, %v770
    %v772 = vrot.slane %v770, 4
    %v774 = vshrl.u32 %v554, 16
    %v776 = vrot.slane %v774, 5
    %v777 = vshll.u32 %v554, 16
    %v779 = vrot.slane %v777, 6
    %v780 = vor.u32 %v776, %v779
    %v781 = vsel %vm557, %v772, %v780
    %782 = vrot.lane.b32.xlu0 %v575, 96
    %v783 = vpop.permute.xlu0 %782
    %784 = vrot.lane.b32.xlu0 %v585, 96
    %v785 = vpop.permute.xlu0 %784
    %786 = vrot.lane.b32.xlu0 %v603, 96
    %v787 = vpop.permute.xlu0 %786
    %788 = vrot.lane.b32.xlu0 %v613, 96
    %v789 = vpop.permute.xlu0 %788
    %790 = vrot.lane.b32.xlu0 %v631, 96
    %v791 = vpop.permute.xlu0 %790
    %792 = vrot.lane.b32.xlu0 %v641, 96
    %v793 = vpop.permute.xlu0 %792
    %794 = vrot.lane.b32.xlu0 %v659, 96
    %v795 = vpop.permute.xlu0 %794
    %796 = vrot.lane.b32.xlu0 %v669, 96
    %v797 = vpop.permute.xlu0 %796
    %798 = vrot.lane.b32.xlu0 %v687, 96
    %v799 = vpop.permute.xlu0 %798
    %800 = vrot.lane.b32.xlu0 %v697, 96
    %v801 = vpop.permute.xlu0 %800
    %802 = vrot.lane.b32.xlu0 %v715, 96
    %v803 = vpop.permute.xlu0 %802
    %804 = vrot.lane.b32.xlu0 %v725, 96
    %v805 = vpop.permute.xlu0 %804
    %806 = vrot.lane.b32.xlu0 %v743, 96
    %v807 = vpop.permute.xlu0 %806
    %808 = vrot.lane.b32.xlu0 %v753, 96
    %v809 = vpop.permute.xlu0 %808
    %810 = vrot.lane.b32.xlu0 %v771, 96
    %v811 = vpop.permute.xlu0 %810
    %812 = vrot.lane.b32.xlu0 %v781, 96
    %v813 = vpop.permute.xlu0 %812
    %vm830 = vcmask 1044224
    %831 = vst.msk [vmem:[#allocation2] sm:$0xf] %vm830, %v783
    %832 = vst.msk [vmem:[#allocation2 + $0x8] sm:$0xf] %vm830, %v785
    %833 = vst.msk [vmem:[#allocation2 + $0x10] sm:$0xf] %vm830, %v787
    %834 = vst.msk [vmem:[#allocation2 + $0x18] sm:$0xf] %vm830, %v789
    %835 = vst.msk [vmem:[#allocation2 + $0x20] sm:$0xf] %vm830, %v791
    %836 = vst.msk [vmem:[#allocation2 + $0x28] sm:$0xf] %vm830, %v793
    %837 = vst.msk [vmem:[#allocation2 + $0x30] sm:$0xf] %vm830, %v795
    %838 = vst.msk [vmem:[#allocation2 + $0x38] sm:$0xf] %vm830, %v797
    %839 = vst.msk [vmem:[#allocation2 + $0x40] sm:$0xf] %vm830, %v799
    %840 = vst.msk [vmem:[#allocation2 + $0x48] sm:$0xf] %vm830, %v801
    %841 = vst.msk [vmem:[#allocation2 + $0x50] sm:$0xf] %vm830, %v803
    %842 = vst.msk [vmem:[#allocation2 + $0x58] sm:$0xf] %vm830, %v805
    %843 = vst.msk [vmem:[#allocation2 + $0x60] sm:$0xf] %vm830, %v807
    %844 = vst.msk [vmem:[#allocation2 + $0x68] sm:$0xf] %vm830, %v809
    %845 = vst.msk [vmem:[#allocation2 + $0x70] sm:$0xf] %vm830, %v811
    %846 = vst.msk [vmem:[#allocation2 + $0x78] sm:$0xf] %vm830, %v813
    %v847 = vld [vmem:[%s0] sm:$0xc]
    %v848 = vld [vmem:[%s0 + $0x4] sm:$0xf]
    %v849 = vld [vmem:[%s0 + $0x8] sm:$0x3]
    %v850 = vld [vmem:[%s0 + $0xc] sm:$0xc]
    %v851 = vld [vmem:[%s0 + $0x10] sm:$0xf]
    %v852 = vld [vmem:[%s0 + $0x14] sm:$0x3]
    %v853 = vld [vmem:[%s0 + $0x18] sm:$0xc]
    %v854 = vld [vmem:[%s0 + $0x1c] sm:$0xf]
    %v855 = vld [vmem:[%s0 + $0x20] sm:$0x3]
    %v856 = vld [vmem:[%s0 + $0x24] sm:$0xc]
    %v857 = vld [vmem:[%s0 + $0x28] sm:$0xf]
    %v858 = vld [vmem:[%s0 + $0x2c] sm:$0x3]
    %v859 = vld [vmem:[%s0 + $0x30] sm:$0xc]
    %v860 = vld [vmem:[%s0 + $0x34] sm:$0xf]
    %v861 = vld [vmem:[%s0 + $0x38] sm:$0x3]
    %v862 = vld [vmem:[%s0 + $0x3c] sm:$0xc]
    %v863 = vld [vmem:[%s0 + $0x40] sm:$0xf]
    %v864 = vld [vmem:[%s0 + $0x44] sm:$0x3]
    %v865 = vld [vmem:[%s0 + $0x48] sm:$0xc]
    %v866 = vld [vmem:[%s0 + $0x4c] sm:$0xf]
    %v867 = vld [vmem:[%s0 + $0x50] sm:$0x3]
    %v868 = vld [vmem:[%s0 + $0x54] sm:$0xc]
    %v869 = vld [vmem:[%s0 + $0x58] sm:$0xf]
    %v870 = vld [vmem:[%s0 + $0x5c] sm:$0x3]
    %vm895 = vcmask 1041408
    %vm896 = vcmask 1045508
    %vm897 = vmor %vm895, %vm896
    %v898 = vrot.slane %v847, 6
    %v899 = vrot.slane %v898, 4
    %v900 = vrot.slane %v848, 6
    %v901 = vsel %vm897, %v899, %v900
    %v902 = vrot.slane %v900, 4
    %v903 = vrot.slane %v849, 6
    %v904 = vsel %vm897, %v902, %v903
    %v905 = vrot.slane %v850, 6
    %v906 = vrot.slane %v905, 4
    %v907 = vrot.slane %v851, 6
    %v908 = vsel %vm897, %v906, %v907
    %v909 = vrot.slane %v907, 4
    %v910 = vrot.slane %v852, 6
    %v911 = vsel %vm897, %v909, %v910
    %v912 = vrot.slane %v853, 6
    %v913 = vrot.slane %v912, 4
    %v914 = vrot.slane %v854, 6
    %v915 = vsel %vm897, %v913, %v914
    %v916 = vrot.slane %v914, 4
    %v917 = vrot.slane %v855, 6
    %v918 = vsel %vm897, %v916, %v917
    %v919 = vrot.slane %v856, 6
    %v920 = vrot.slane %v919, 4
    %v921 = vrot.slane %v857, 6
    %v922 = vsel %vm897, %v920, %v921
    %v923 = vrot.slane %v921, 4
    %v924 = vrot.slane %v858, 6
    %v925 = vsel %vm897, %v923, %v924
    %v926 = vrot.slane %v859, 6
    %v927 = vrot.slane %v926, 4
    %v928 = vrot.slane %v860, 6
    %v929 = vsel %vm897, %v927, %v928
    %v930 = vrot.slane %v928, 4
    %v931 = vrot.slane %v861, 6
    %v932 = vsel %vm897, %v930, %v931
    %v933 = vrot.slane %v862, 6
    %v934 = vrot.slane %v933, 4
    %v935 = vrot.slane %v863, 6
    %v936 = vsel %vm897, %v934, %v935
    %v937 = vrot.slane %v935, 4
    %v938 = vrot.slane %v864, 6
    %v939 = vsel %vm897, %v937, %v938
    %v940 = vrot.slane %v865, 6
    %v941 = vrot.slane %v940, 4
    %v942 = vrot.slane %v866, 6
    %v943 = vsel %vm897, %v941, %v942
    %v944 = vrot.slane %v942, 4
    %v945 = vrot.slane %v867, 6
    %v946 = vsel %vm897, %v944, %v945
    %v947 = vrot.slane %v868, 6
    %v948 = vrot.slane %v947, 4
    %v949 = vrot.slane %v869, 6
    %v950 = vsel %vm897, %v948, %v949
    %v951 = vrot.slane %v949, 4
    %v952 = vrot.slane %v870, 6
    %v953 = vsel %vm897, %v951, %v952
    %970 = vst.msk [vmem:[#allocation2 + $0x4] sm:$0xf] %vm58, %v901
    %971 = vst.msk [vmem:[#allocation2 + $0xc] sm:$0xf] %vm58, %v904
    %972 = vst.msk [vmem:[#allocation2 + $0x14] sm:$0xf] %vm58, %v908
    %973 = vst.msk [vmem:[#allocation2 + $0x1c] sm:$0xf] %vm58, %v911
    %974 = vst.msk [vmem:[#allocation2 + $0x24] sm:$0xf] %vm58, %v915
    %975 = vst.msk [vmem:[#allocation2 + $0x2c] sm:$0xf] %vm58, %v918
    %976 = vst.msk [vmem:[#allocation2 + $0x34] sm:$0xf] %vm58, %v922
    %977 = vst.msk [vmem:[#allocation2 + $0x3c] sm:$0xf] %vm58, %v925
    %978 = vst.msk [vmem:[#allocation2 + $0x44] sm:$0xf] %vm58, %v929
    %979 = vst.msk [vmem:[#allocation2 + $0x4c] sm:$0xf] %vm58, %v932
    %980 = vst.msk [vmem:[#allocation2 + $0x54] sm:$0xf] %vm58, %v936
    %981 = vst.msk [vmem:[#allocation2 + $0x5c] sm:$0xf] %vm58, %v939
    %982 = vst.msk [vmem:[#allocation2 + $0x64] sm:$0xf] %vm58, %v943
    %983 = vst.msk [vmem:[#allocation2 + $0x6c] sm:$0xf] %vm58, %v946
    %984 = vst.msk [vmem:[#allocation2 + $0x74] sm:$0xf] %vm58, %v950
    %985 = vst.msk [vmem:[#allocation2 + $0x7c] sm:$0xf] %vm58, %v953
    %v986 = vld [vmem:[#allocation2] sm:$0xff]
    %v987 = vld [vmem:[#allocation2 + $0x8] sm:$0xff]
    %v988 = vld [vmem:[#allocation2 + $0x10] sm:$0xff]
    %v989 = vld [vmem:[#allocation2 + $0x18] sm:$0xff]
    %v990 = vld [vmem:[#allocation2 + $0x20] sm:$0xff]
    %v991 = vld [vmem:[#allocation2 + $0x28] sm:$0xff]
    %v992 = vld [vmem:[#allocation2 + $0x30] sm:$0xff]
    %v993 = vld [vmem:[#allocation2 + $0x38] sm:$0xff]
    %v994 = vld [vmem:[#allocation2 + $0x40] sm:$0xff]
    %v995 = vld [vmem:[#allocation2 + $0x48] sm:$0xff]
    %v996 = vld [vmem:[#allocation2 + $0x50] sm:$0xff]
    %v997 = vld [vmem:[#allocation2 + $0x58] sm:$0xff]
    %v998 = vld [vmem:[#allocation2 + $0x60] sm:$0xff]
    %v999 = vld [vmem:[#allocation2 + $0x68] sm:$0xff]
    %v1000 = vld [vmem:[#allocation2 + $0x70] sm:$0xff]
    %v1001 = vld [vmem:[#allocation2 + $0x78] sm:$0xff]
    %v1018 = vunpack.c.l.b16 %v986
    %v1019 = vunpack.c.h.b16 %v986
    %v1020 = vunpack.c.l.b16 %v987
    %v1021 = vunpack.c.h.b16 %v987
    %v1022 = vunpack.c.l.b16 %v988
    %v1023 = vunpack.c.h.b16 %v988
    %v1024 = vunpack.c.l.b16 %v989
    %v1025 = vunpack.c.h.b16 %v989
    %v1026 = vunpack.c.l.b16 %v990
    %v1027 = vunpack.c.h.b16 %v990
    %v1028 = vunpack.c.l.b16 %v991
    %v1029 = vunpack.c.h.b16 %v991
    %v1030 = vunpack.c.l.b16 %v992
    %v1031 = vunpack.c.h.b16 %v992
    %v1032 = vunpack.c.l.b16 %v993
    %v1033 = vunpack.c.h.b16 %v993
    %v1034 = vunpack.c.l.b16 %v994
    %v1035 = vunpack.c.h.b16 %v994
    %v1036 = vunpack.c.l.b16 %v995
    %v1037 = vunpack.c.h.b16 %v995
    %v1038 = vunpack.c.l.b16 %v996
    %v1039 = vunpack.c.h.b16 %v996
    %v1040 = vunpack.c.l.b16 %v997
    %v1041 = vunpack.c.h.b16 %v997
    %v1042 = vunpack.c.l.b16 %v998
    %v1043 = vunpack.c.h.b16 %v998
    %v1044 = vunpack.c.l.b16 %v999
    %v1045 = vunpack.c.h.b16 %v999
    %v1046 = vunpack.c.l.b16 %v1000
    %v1047 = vunpack.c.h.b16 %v1000
    %v1048 = vunpack.c.l.b16 %v1001
    %v1049 = vunpack.c.h.b16 %v1001
    %v1050 = vpack.c.b16 %v1020, %v1018
    %v1051 = vpack.c.b16 %v1021, %v1019
    %v1052 = vpack.c.b16 %v1024, %v1022
    %v1053 = vpack.c.b16 %v1025, %v1023
    %v1054 = vpack.c.b16 %v1028, %v1026
    %v1055 = vpack.c.b16 %v1029, %v1027
    %v1056 = vpack.c.b16 %v1032, %v1030
    %v1057 = vpack.c.b16 %v1033, %v1031
    %v1058 = vpack.c.b16 %v1036, %v1034
    %v1059 = vpack.c.b16 %v1037, %v1035
    %v1060 = vpack.c.b16 %v1040, %v1038
    %v1061 = vpack.c.b16 %v1041, %v1039
    %v1062 = vpack.c.b16 %v1044, %v1042
    %v1063 = vpack.c.b16 %v1045, %v1043
    %v1064 = vpack.c.b16 %v1048, %v1046
    %v1065 = vpack.c.b16 %v1049, %v1047
    %v1094 = vunpack.c.l.b16 %v22
    %v1095 = vunpack.c.l.b16 %v23
    %v1096 = vunpack.c.l.b16 %v24
    %v1097 = vunpack.c.l.b16 %v25
    %v1098 = vunpack.c.l.b16 %v26
    %v1099 = vunpack.c.l.b16 %v27
    %v1100 = vunpack.c.l.b16 %v28
    %v1101 = vunpack.c.l.b16 %v29
    %v1102 = vunpack.c.l.b16 %v30
    %v1103 = vunpack.c.l.b16 %v31
    %v1104 = vunpack.c.l.b16 %v32
    %v1105 = vunpack.c.l.b16 %v33
    %v1106 = vunpack.c.l.b16 %v34
    %v1107 = vunpack.c.l.b16 %v35
    %v1108 = vunpack.c.l.b16 %v36
    %v1109 = vunpack.c.l.b16 %v37
    %v1110 = vunpack.c.l.b16 %v38
    %v1111 = vunpack.c.l.b16 %v39
    %v1112 = vunpack.c.l.b16 %v40
    %v1113 = vunpack.c.l.b16 %v41
    %v1114 = vpack.c.b16 %v1095, %v1094
    %v1115 = vpack.c.b16 %v1097, %v1096
    %v1116 = vpack.c.b16 %v1099, %v1098
    %v1117 = vpack.c.b16 %v1101, %v1100
    %v1118 = vpack.c.b16 %v1103, %v1102
    %v1119 = vpack.c.b16 %v1105, %v1104
    %v1120 = vpack.c.b16 %v1107, %v1106
    %v1121 = vpack.c.b16 %v1109, %v1108
    %v1122 = vpack.c.b16 %v1111, %v1110
    %v1123 = vpack.c.b16 %v1113, %v1112
    %vm1134 = vcmask 261120
    %v1136 = vsel %vm1134, %v1051, 0
    %v1139 = vsel %vm1134, %v1053, 0
    %v1142 = vsel %vm1134, %v1055, 0
    %v1145 = vsel %vm1134, %v1057, 0
    %v1148 = vsel %vm1134, %v1059, 0
    %v1151 = vsel %vm1134, %v1061, 0
    %v1154 = vsel %vm1134, %v1063, 0
    %v1157 = vsel %vm1134, %v1065, 0
    %1159 = vmatpush.bf16.msra.mxu0 %v1121
    %1160 = vmatpush.bf16.msra.mxu0 %v1120
    %1161 = vmatpush.bf16.msra.mxu0 %v1119
    %1162 = vmatpush.bf16.msra.mxu0 %v1118
    %1163 = vmatpush.bf16.msra.mxu0 %v1117
    %1164 = vmatpush.bf16.msra.mxu0 %v1116
    %1165 = vmatpush.bf16.msra.mxu0 %v1115
    %1166 = vmatpush.bf16.msra.mxu0 %v1114
    %1167 = vmatmul.bf16.gmra.mxu0 %v1050
    %v1168 = vpop.f32.mrf.mxu0
    %v1169 = vadd.f32 0.0, %v1168
    %v1170 = vpop.f32.mrf.mxu0
    %v1171 = vadd.f32 0.0, %v1170
    %1172 = vmatmul.bf16.gmra.mxu0 %v1052
    %v1173 = vpop.f32.mrf.mxu0
    %v1174 = vadd.f32 0.0, %v1173
    %v1175 = vpop.f32.mrf.mxu0
    %v1176 = vadd.f32 0.0, %v1175
    %1177 = vmatmul.bf16.gmra.mxu0 %v1054
    %v1178 = vpop.f32.mrf.mxu0
    %v1179 = vadd.f32 0.0, %v1178
    %v1180 = vpop.f32.mrf.mxu0
    %v1181 = vadd.f32 0.0, %v1180
    %1182 = vmatmul.bf16.gmra.mxu0 %v1056
    %v1183 = vpop.f32.mrf.mxu0
    %v1184 = vadd.f32 0.0, %v1183
    %v1185 = vpop.f32.mrf.mxu0
    %v1186 = vadd.f32 0.0, %v1185
    %1187 = vmatmul.bf16.gmra.mxu0 %v1058
    %v1188 = vpop.f32.mrf.mxu0
    %v1189 = vadd.f32 0.0, %v1188
    %v1190 = vpop.f32.mrf.mxu0
    %v1191 = vadd.f32 0.0, %v1190
    %1192 = vmatmul.bf16.gmra.mxu0 %v1060
    %v1193 = vpop.f32.mrf.mxu0
    %v1194 = vadd.f32 0.0, %v1193
    %v1195 = vpop.f32.mrf.mxu0
    %v1196 = vadd.f32 0.0, %v1195
    %1197 = vmatmul.bf16.gmra.mxu0 %v1062
    %v1198 = vpop.f32.mrf.mxu0
    %v1199 = vadd.f32 0.0, %v1198
    %v1200 = vpop.f32.mrf.mxu0
    %v1201 = vadd.f32 0.0, %v1200
    %1202 = vmatmul.bf16.gmra.mxu0 %v1064
    %v1203 = vpop.f32.mrf.mxu0
    %v1204 = vadd.f32 0.0, %v1203
    %v1205 = vpop.f32.mrf.mxu0
    %v1206 = vadd.f32 0.0, %v1205
    %1207 = vdwg.mxu0
    %1208 = vmatpush.bf16.msra.mxu0 0
    %1209 = vmatpush.bf16.msra.mxu0 0
    %1210 = vmatpush.bf16.msra.mxu0 0
    %1211 = vmatpush.bf16.msra.mxu0 0
    %1212 = vmatpush.bf16.msra.mxu0 0
    %1213 = vmatpush.bf16.msra.mxu0 0
    %1214 = vmatpush.bf16.msra.mxu0 %v1123
    %1215 = vmatpush.bf16.msra.mxu0 %v1122
    %1216 = vmatmul.bf16.gmra.mxu0 %v1136
    %v1217 = vpop.f32.mrf.mxu0
    %v1218 = vadd.f32 %v1169, %v1217
    %v1219 = vpop.f32.mrf.mxu0
    %v1220 = vadd.f32 %v1171, %v1219
    %1221 = vmatmul.bf16.gmra.mxu0 %v1139
    %v1222 = vpop.f32.mrf.mxu0
    %v1223 = vadd.f32 %v1174, %v1222
    %v1224 = vpop.f32.mrf.mxu0
    %v1225 = vadd.f32 %v1176, %v1224
    %1226 = vmatmul.bf16.gmra.mxu0 %v1142
    %v1227 = vpop.f32.mrf.mxu0
    %v1228 = vadd.f32 %v1179, %v1227
    %v1229 = vpop.f32.mrf.mxu0
    %v1230 = vadd.f32 %v1181, %v1229
    %1231 = vmatmul.bf16.gmra.mxu0 %v1145
    %v1232 = vpop.f32.mrf.mxu0
    %v1233 = vadd.f32 %v1184, %v1232
    %v1234 = vpop.f32.mrf.mxu0
    %v1235 = vadd.f32 %v1186, %v1234
    %1236 = vmatmul.bf16.gmra.mxu0 %v1148
    %v1237 = vpop.f32.mrf.mxu0
    %v1238 = vadd.f32 %v1189, %v1237
    %v1239 = vpop.f32.mrf.mxu0
    %v1240 = vadd.f32 %v1191, %v1239
    %1241 = vmatmul.bf16.gmra.mxu0 %v1151
    %v1242 = vpop.f32.mrf.mxu0
    %v1243 = vadd.f32 %v1194, %v1242
    %v1244 = vpop.f32.mrf.mxu0
    %v1245 = vadd.f32 %v1196, %v1244
    %1246 = vmatmul.bf16.gmra.mxu0 %v1154
    %v1247 = vpop.f32.mrf.mxu0
    %v1248 = vadd.f32 %v1199, %v1247
    %v1249 = vpop.f32.mrf.mxu0
    %v1250 = vadd.f32 %v1201, %v1249
    %1251 = vmatmul.bf16.gmra.mxu0 %v1157
    %v1252 = vpop.f32.mrf.mxu0
    %v1253 = vadd.f32 %v1204, %v1252
    %v1254 = vpop.f32.mrf.mxu0
    %v1255 = vadd.f32 %v1206, %v1254
    %1256 = vdwg.mxu0
    %v1257 = vmax.f32 %v1218, %v1220
    %v1258 = vrot.slane %v1257, 4
    %v1259 = vmax.f32 %v1257, %v1258
    %v1260 = vrot.slane %v1259, 2
    %v1261 = vmax.f32 %v1259, %v1260
    %v1262 = vrot.slane %v1261, 1
    %v1263 = vmax.f32 %v1261, %v1262
    %v1264 = vmax.f32 %v1223, %v1225
    %v1265 = vrot.slane %v1264, 4
    %v1266 = vmax.f32 %v1264, %v1265
    %v1267 = vrot.slane %v1266, 2
    %v1268 = vmax.f32 %v1266, %v1267
    %v1269 = vrot.slane %v1268, 1
    %v1270 = vmax.f32 %v1268, %v1269
    %v1271 = vmax.f32 %v1228, %v1230
    %v1272 = vrot.slane %v1271, 4
    %v1273 = vmax.f32 %v1271, %v1272
    %v1274 = vrot.slane %v1273, 2
    %v1275 = vmax.f32 %v1273, %v1274
    %v1276 = vrot.slane %v1275, 1
    %v1277 = vmax.f32 %v1275, %v1276
    %v1278 = vmax.f32 %v1233, %v1235
    %v1279 = vrot.slane %v1278, 4
    %v1280 = vmax.f32 %v1278, %v1279
    %v1281 = vrot.slane %v1280, 2
    %v1282 = vmax.f32 %v1280, %v1281
    %v1283 = vrot.slane %v1282, 1
    %v1284 = vmax.f32 %v1282, %v1283
    %v1285 = vmax.f32 %v1238, %v1240
    %v1286 = vrot.slane %v1285, 4
    %v1287 = vmax.f32 %v1285, %v1286
    %v1288 = vrot.slane %v1287, 2
    %v1289 = vmax.f32 %v1287, %v1288
    %v1290 = vrot.slane %v1289, 1
    %v1291 = vmax.f32 %v1289, %v1290
    %v1292 = vmax.f32 %v1243, %v1245
    %v1293 = vrot.slane %v1292, 4
    %v1294 = vmax.f32 %v1292, %v1293
    %v1295 = vrot.slane %v1294, 2
    %v1296 = vmax.f32 %v1294, %v1295
    %v1297 = vrot.slane %v1296, 1
    %v1298 = vmax.f32 %v1296, %v1297
    %v1299 = vmax.f32 %v1248, %v1250
    %v1300 = vrot.slane %v1299, 4
    %v1301 = vmax.f32 %v1299, %v1300
    %v1302 = vrot.slane %v1301, 2
    %v1303 = vmax.f32 %v1301, %v1302
    %v1304 = vrot.slane %v1303, 1
    %v1305 = vmax.f32 %v1303, %v1304
    %v1306 = vmax.f32 %v1253, %v1255
    %v1307 = vrot.slane %v1306, 4
    %v1308 = vmax.f32 %v1306, %v1307
    %v1309 = vrot.slane %v1308, 2
    %v1310 = vmax.f32 %v1308, %v1309
    %v1311 = vrot.slane %v1310, 1
    %v1312 = vmax.f32 %v1310, %v1311
    %v1313 = vld [vmem:[%s2] sm:$0x1]
    %v1315 = vperm.slane %v1313, 0
    %v1317 = vadd.f32 %v1263, %v1315
    %v1318 = vadd.f32 %v1270, %v1315
    %v1319 = vadd.f32 %v1277, %v1315
    %v1320 = vadd.f32 %v1284, %v1315
    %v1321 = vadd.f32 %v1291, %v1315
    %v1322 = vadd.f32 %v1298, %v1315
    %v1323 = vadd.f32 %v1305, %v1315
    %v1324 = vadd.f32 %v1312, %v1315
    %v1325 = vmax.f32 %v1317, 0.0
    %v1326 = vmax.f32 %v1318, 0.0
    %v1327 = vmax.f32 %v1319, 0.0
    %v1328 = vmax.f32 %v1320, 0.0
    %v1329 = vmax.f32 %v1321, 0.0
    %v1330 = vmax.f32 %v1322, 0.0
    %v1331 = vmax.f32 %v1323, 0.0
    %v1332 = vmax.f32 %v1324, 0.0
    %v1333 = vpack.c.bf16 %v1325, %v1325
    %v1334 = vpack.c.bf16 %v1326, %v1326
    %v1335 = vpack.c.bf16 %v1327, %v1327
    %v1336 = vpack.c.bf16 %v1328, %v1328
    %v1337 = vpack.c.bf16 %v1329, %v1329
    %v1338 = vpack.c.bf16 %v1330, %v1330
    %v1339 = vpack.c.bf16 %v1331, %v1331
    %v1340 = vpack.c.bf16 %v1332, %v1332
    %v1341 = vld [vmem:[%s3] sm:$0xf]
    %v1342 = vld [vmem:[%s3 + $0x4] sm:$0xf]
    %v1343 = vld [vmem:[%s3 + $0x8] sm:$0xf]
    %v1344 = vld [vmem:[%s3 + $0xc] sm:$0xf]
    %v1345 = vld [vmem:[%s3 + $0x10] sm:$0xf]
    %v1346 = vld [vmem:[%s3 + $0x14] sm:$0xf]
    %v1347 = vld [vmem:[%s3 + $0x18] sm:$0xf]
    %v1348 = vld [vmem:[%s3 + $0x1c] sm:$0xf]
    %v1349 = vld [vmem:[%s3 + $0x20] sm:$0xf]
    %v1350 = vld [vmem:[%s3 + $0x24] sm:$0xf]
    %v1351 = vld [vmem:[%s3 + $0x28] sm:$0xf]
    %v1352 = vld [vmem:[%s3 + $0x2c] sm:$0xf]
    %v1353 = vld [vmem:[%s3 + $0x30] sm:$0xf]
    %v1354 = vld [vmem:[%s3 + $0x34] sm:$0xf]
    %v1355 = vld [vmem:[%s3 + $0x38] sm:$0xf]
    %v1356 = vld [vmem:[%s3 + $0x3c] sm:$0xf]
    %v1357 = vld [vmem:[%s4] sm:$0x1]
    %v1359 = vperm.slane %v1357, 0
    %v1369 = vunpack.c.l.b16 %v1333
    %v1370 = vunpack.c.l.b16 %v1334
    %v1371 = vunpack.c.l.b16 %v1335
    %v1372 = vunpack.c.l.b16 %v1336
    %v1373 = vunpack.c.l.b16 %v1337
    %v1374 = vunpack.c.l.b16 %v1338
    %v1375 = vunpack.c.l.b16 %v1339
    %v1376 = vunpack.c.l.b16 %v1340
    %v1377 = vrot.slane %v1370, 7
    %vm1378 = vcmask 1041409
    %v1379 = vsel %vm1378, %v1377, %v1369
    %v1380 = vrot.slane %v1371, 6
    %vm1381 = vcmask 1042434
    %v1382 = vsel %vm1381, %v1380, %v1379
    %v1383 = vrot.slane %v1372, 5
    %vm1384 = vcmask 1043459
    %v1385 = vsel %vm1384, %v1383, %v1382
    %v1386 = vrot.slane %v1373, 4
    %vm1387 = vcmask 1044484
    %v1388 = vsel %vm1387, %v1386, %v1385
    %v1389 = vrot.slane %v1374, 3
    %vm1390 = vcmask 1045509
    %v1391 = vsel %vm1390, %v1389, %v1388
    %v1392 = vrot.slane %v1375, 2
    %vm1393 = vcmask 1046534
    %v1394 = vsel %vm1393, %v1392, %v1391
    %v1395 = vrot.slane %v1376, 1
    %vm1396 = vcmask 1047559
    %v1397 = vsel %vm1396, %v1395, %v1394
    %v1398 = vpack.c.b16 %v1397, %v1397
    %v1416 = vunpack.c.l.b16 %v1341
    %v1417 = vunpack.c.l.b16 %v1342
    %v1418 = vunpack.c.l.b16 %v1343
    %v1419 = vunpack.c.l.b16 %v1344
    %v1420 = vunpack.c.l.b16 %v1345
    %v1421 = vunpack.c.l.b16 %v1346
    %v1422 = vunpack.c.l.b16 %v1347
    %v1423 = vunpack.c.l.b16 %v1348
    %v1424 = vunpack.c.l.b16 %v1349
    %v1425 = vunpack.c.l.b16 %v1350
    %v1426 = vunpack.c.l.b16 %v1351
    %v1427 = vunpack.c.l.b16 %v1352
    %v1428 = vunpack.c.l.b16 %v1353
    %v1429 = vunpack.c.l.b16 %v1354
    %v1430 = vunpack.c.l.b16 %v1355
    %v1431 = vunpack.c.l.b16 %v1356
    %v1432 = vpack.c.b16 %v1417, %v1416
    %v1433 = vpack.c.b16 %v1419, %v1418
    %v1434 = vpack.c.b16 %v1421, %v1420
    %v1435 = vpack.c.b16 %v1423, %v1422
    %v1436 = vpack.c.b16 %v1425, %v1424
    %v1437 = vpack.c.b16 %v1427, %v1426
    %v1438 = vpack.c.b16 %v1429, %v1428
    %v1439 = vpack.c.b16 %v1431, %v1430
    %1448 = vmatpush.bf16.msra.mxu0 %v1439
    %1449 = vmatpush.bf16.msra.mxu0 %v1438
    %1450 = vmatpush.bf16.msra.mxu0 %v1437
    %1451 = vmatpush.bf16.msra.mxu0 %v1436
    %1452 = vmatpush.bf16.msra.mxu0 %v1435
    %1453 = vmatpush.bf16.msra.mxu0 %v1434
    %1454 = vmatpush.bf16.msra.mxu0 %v1433
    %1455 = vmatpush.bf16.msra.mxu0 %v1432
    %1456 = vmatmul.bf16.gmra.mxu0 %v1398
    %v1457 = vpop.f32.mrf.mxu0
    %v1458 = vadd.f32 %v1359, %v1457
    %v1459 = vpop.f32.mrf.mxu0
    %1460 = vdwg.mxu0
    %1461 = vst [vmem:[#allocation3] sm:$0xff] %v1458
    // Predicated region
    $region22: #{tpu_custom_call.1} parent=1 // pred_check
      _
    $region23: #{tpu_custom_call.1} parent=1 // pred_check_branch
      %1463 = sbr.rel (0) target = $region25
    $region24: #{tpu_custom_call.1} parent=1 // pred_region
      %1465 = vsyncadd [#allocation4], 0
      %s1467 = sshll.u32 [#allocation3], 4
      %s1468 = int_to_ptr.vmem [resolvable:$true] %s1467
      %s1469 = sshll.u32 %s5, 4
      %s1470 = int_to_ptr.hbm [resolvable:$true] %s1469
      %1472 = dma.vmem_to_hbm [thread:$0]  %s1468, 128, %s1470, [#allocation4]
    $region25: #{tpu_custom_call.1} parent=1 // pred_fallthru
      _
    // Predicated region
    $region26: #{tpu_custom_call.1} parent=1 // pred_check
      _
    $region27: #{tpu_custom_call.1} parent=1 // pred_check_branch
      %1474 = sbr.rel (0) target = $region29
    $region28: #{tpu_custom_call.1} parent=1 // pred_region
      %1476 = dma.done [#allocation4], 128
    $region29: #{tpu_custom_call.1} parent=1 // pred_fallthru
      _
    %1477 = vsyncpa [#allocation4], 1

</llo_original>
